<compile_context>
chip_gen: v6e
topology: v6e:2x2x1
jax: 0.10.0
libtpu: 0.0.40
codegen_flags: <defaults>
</compile_context>

<pallas_src>
import functools

import jax
import jax.numpy as jnp
import numpy as np
from jax import lax
from jax.experimental import pallas as pl
from jax.experimental.pallas import tpu as pltpu

LEAKY_SLOPE = 0.2
IN_EPS = 1e-5        # nn.InstanceNorm2d default eps
PIX_EPS = 1e-8       # PixelNorm eps


def _round_up(n, m):
    return (n + m - 1) // m * m


def _generator_cell_kernel(
    x_ref, n1_ref, n2_ref, styles_ref, masks_ref,
    nw1_ref, nw2_ref, cw_ref, cb_ref,
    o_ref,
    patches_ref,
    *, img_w, c_out_real,
):
    Ci = x_ref.shape[1]          # padded input channels (multiple of 8)
    Co = o_ref.shape[1]          # padded output channels (multiple of 8)
    HW = x_ref.shape[2]          # flattened spatial (lane axis)

    x = x_ref[0]                 # (Ci, HW)
    n1 = n1_ref[0]               # (1, HW)
    n2 = n2_ref[0]               # (1, HW)

    # Precomputed style vectors (scale1, shift1, scale2, shift2), channel-padded.
    s1_scale = styles_ref[0, 0:Ci, :]                        # (Ci, 1)
    s1_shift = styles_ref[0, Ci:2 * Ci, :]
    s2_scale = styles_ref[0, 2 * Ci:2 * Ci + Co, :]          # (Co, 1)
    s2_shift = styles_ref[0, 2 * Ci + Co:2 * Ci + 2 * Co, :]

    # --- NoiceChannel 1: x + weights * noise ---
    x = x + nw1_ref[...] * n1

    # --- AdaIN 1: instance norm over H*W (lane reduction), single-pass variance.
    #     Fold the norm + style affine into ONE mul + ONE add on the full slab:
    #       out = a1 * x + b1,  a1 = scale * rsqrt(var+eps), b1 = shift - a1*mean ---
    mean = jnp.mean(x, axis=1, keepdims=True)                # (Ci, 1)
    var = jnp.mean(x * x, axis=1, keepdims=True) - mean * mean
    a1 = s1_scale * lax.rsqrt(var + IN_EPS)                  # (Ci, 1)
    b1 = s1_shift - a1 * mean
    xa = a1 * x + b1

    # --- EqualizedConv 3x3 (scale folded into cw): 9 masked lane-rolls written
    #     directly into the im2col scratch (no concat copy) -> one MXU matmul.
    #     masks_ref row k zeroes out-of-image neighbours of tap k. ---
    k = 0
    for ky in (-1, 0, 1):
        for kx in (-1, 0, 1):
            off = ky * img_w + kx
            if off == 0:
                tap = xa
            else:
                tap = pltpu.roll(xa, shift=(-off) % HW, axis=1) * masks_ref[k:k + 1, :]
            patches_ref[k * Ci:(k + 1) * Ci, :] = tap        # tile-aligned sublane slice
            k += 1
    y = jnp.dot(cw_ref[...], patches_ref[...],
                preferred_element_type=jnp.float32) + cb_ref[...]   # (Co, HW)

    # --- PixelNorm over channels (sublane reduction), rsqrt-multiply.
    #     Padded output channels are exactly zero so they don't perturb sumsq. ---
    sumsq = jnp.sum(y * y, axis=0, keepdims=True)            # (1, HW)
    y = y * lax.rsqrt(sumsq * (1.0 / c_out_real) + PIX_EPS)

    # --- LeakyReLU(0.2) ---
    y = jnp.where(y > 0, y, LEAKY_SLOPE * y)

    # --- NoiceChannel 2 ---
    y = y + nw2_ref[...] * n2

    # --- AdaIN 2 (same affine fold) ---
    mean2 = jnp.mean(y, axis=1, keepdims=True)
    var2 = jnp.mean(y * y, axis=1, keepdims=True) - mean2 * mean2
    a2 = s2_scale * lax.rsqrt(var2 + IN_EPS)
    b2 = s2_shift - a2 * mean2
    o_ref[0] = a2 * y + b2


def prepare_params(p, H, W, w_dim):
    """One-time fold of equalized scales + repack of weights into kernel layout."""
    Cin = p["s1w"].shape[1]
    Cout = p["s2w"].shape[1]
    Ci = _round_up(Cin, 8)
    Co = _round_up(Cout, 8)
    HW = H * W
    lin_scale = (2.0 / w_dim) ** 0.5
    conv_scale = (2.0 / (Cin * 9)) ** 0.5

    def pad_cols(a, c):
        a = np.asarray(a, np.float32)
        return np.pad(a, ((0, 0), (0, c - a.shape[1])))

    def pad_vec(a, c):
        a = np.asarray(a, np.float32).reshape(-1)
        return np.pad(a, (0, c - a.shape[0]))

    # Fused style projection: one (WD, 2*Ci + 2*Co) weight, lin_scale folded.
    style_w = np.concatenate(
        [pad_cols(p["s1w"], Ci), pad_cols(p["t1w"], Ci),
         pad_cols(p["s2w"], Co), pad_cols(p["t2w"], Co)], axis=1) * lin_scale
    style_b = np.concatenate(
        [pad_vec(p["s1b"], Ci), pad_vec(p["t1b"], Ci),
         pad_vec(p["s2b"], Co), pad_vec(p["t2b"], Co)])

    # Conv weight OIHW -> (Co, 9*Ci) with K ordered (ky, kx, ci); conv_scale folded.
    cw = np.asarray(p["conv_w"], np.float32)                  # (Cout, Cin, 3, 3)
    cw = np.transpose(cw, (0, 2, 3, 1))                       # (Cout, 3, 3, Cin)
    cw = np.pad(cw, ((0, Co - Cout), (0, 0), (0, 0), (0, Ci - Cin)))
    cw = cw.reshape(Co, 9 * Ci) * conv_scale

    cb = pad_vec(p["conv_b"], Co).reshape(Co, 1)
    nw1 = pad_vec(p["nw1"], Ci).reshape(Ci, 1)
    nw2 = pad_vec(p["nw2"], Co).reshape(Co, 1)

    # Per-tap edge masks on the flattened spatial axis (1.0 = neighbour in bounds).
    hh, ww = np.meshgrid(np.arange(H), np.arange(W), indexing="ij")
    masks = np.ones((9, HW), np.float32)
    k = 0
    for ky in (-1, 0, 1):
        for kx in (-1, 0, 1):
            valid = ((hh + ky >= 0) & (hh + ky < H) &
                     (ww + kx >= 0) & (ww + kx < W))
            masks[k] = valid.reshape(HW).astype(np.float32)
            k += 1

    return {
        "Ci": Ci, "Co": Co, "Cin": Cin, "Cout": Cout,
        "style_w": jnp.asarray(style_w), "style_b": jnp.asarray(style_b),
        "conv_w_mat": jnp.asarray(cw), "conv_b": jnp.asarray(cb),
        "nw1": jnp.asarray(nw1), "nw2": jnp.asarray(nw2),
        "edge_masks": jnp.asarray(masks),
    }


def generator_cell(x, w, noise1, noise2, kp):
    """x: (B,Cin,H,W) NCHW, w: (B,WD), noise{1,2}: (B,1,H,W). Returns (B,Cout,H,W)."""
    B, Cin, H, Wsp = x.shape
    HW = H * Wsp
    Ci, Co, Cout = kp["Ci"], kp["Co"], kp["Cout"]
    S = 2 * Ci + 2 * Co

    # Channels-first lane-dense layout: (B, C, H*W); pad channels to multiple of 8.
    x_k = jnp.pad(x, ((0, 0), (0, Ci - Cin), (0, 0), (0, 0))).reshape(B, Ci, HW)
    n1_k = noise1.reshape(B, 1, HW)
    n2_k = noise2.reshape(B, 1, HW)
    # All four style projections in one batched GEMM (lin_scale already folded).
    styles = (w @ kp["style_w"] + kp["style_b"])[:, :, None]   # (B, S, 1)

    kernel = functools.partial(_generator_cell_kernel, img_w=Wsp, c_out_real=Cout)

    out = pl.pallas_call(
        kernel,
        out_shape=jax.ShapeDtypeStruct((B, Co, HW), jnp.float32),
        grid=(B,),
        in_specs=[
            pl.BlockSpec((1, Ci, HW), lambda b: (b, 0, 0)),     # x
            pl.BlockSpec((1, 1, HW), lambda b: (b, 0, 0)),      # noise1
            pl.BlockSpec((1, 1, HW), lambda b: (b, 0, 0)),      # noise2
            pl.BlockSpec((1, S, 1), lambda b: (b, 0, 0)),       # fused styles
            pl.BlockSpec((9, HW), lambda b: (0, 0)),            # conv edge masks (const)
            pl.BlockSpec((Ci, 1), lambda b: (0, 0)),            # noise weights 1 (const)
            pl.BlockSpec((Co, 1), lambda b: (0, 0)),            # noise weights 2 (const)
            pl.BlockSpec((Co, 9 * Ci), lambda b: (0, 0)),       # conv weight (im2col, const)
            pl.BlockSpec((Co, 1), lambda b: (0, 0)),            # conv bias (const)
        ],
        out_specs=pl.BlockSpec((1, Co, HW), lambda b: (b, 0, 0)),
        scratch_shapes=[pltpu.VMEM((9 * Ci, HW), jnp.float32)], # im2col patches
        compiler_params=pltpu.CompilerParams(
            dimension_semantics=("parallel",)),                 # batch-independent
    )(x_k, n1_k, n2_k, styles, kp["edge_masks"], kp["nw1"], kp["nw2"],
      kp["conv_w_mat"], kp["conv_b"])

    return out[:, :Cout, :].reshape(B, Cout, H, Wsp)


def reference(x, w, noise1, noise2, p):
    """Plain-JAX reference (NCHW) mirroring the PyTorch forward."""
    B, Cin, H, Wsp = x.shape
    Cout = p["conv_w"].shape[0]
    WD = w.shape[1]
    lin_scale = (2.0 / WD) ** 0.5
    conv_scale = (2.0 / (Cin * 9)) ** 0.5

    def inorm(t):
        m = t.mean(axis=(2, 3), keepdims=True)
        v = ((t - m) ** 2).mean(axis=(2, 3), keepdims=True)
        return (t - m) / jnp.sqrt(v + IN_EPS)

    x = x + p["nw1"].reshape(1, Cin, 1, 1) * noise1
    xn = inorm(x)
    ss = (w * lin_scale) @ p["s1w"] + p["s1b"]
    sh = (w * lin_scale) @ p["t1w"] + p["t1b"]
    x = ss[:, :, None, None] * xn + sh[:, :, None, None]

    y = lax.conv_general_dilated(
        x * conv_scale, p["conv_w"], window_strides=(1, 1), padding="SAME",
        dimension_numbers=("NCHW", "OIHW", "NCHW"),
        precision=lax.Precision.HIGHEST)
    y = y + p["conv_b"].reshape(1, Cout, 1, 1)
    y = y / jnp.sqrt((y ** 2).sum(axis=1, keepdims=True) / Cout + PIX_EPS)
    y = jnp.where(y > 0, y, LEAKY_SLOPE * y)

    y = y + p["nw2"].reshape(1, Cout, 1, 1) * noise2
    yn = inorm(y)
    ss2 = (w * lin_scale) @ p["s2w"] + p["s2b"]
    sh2 = (w * lin_scale) @ p["t2w"] + p["t2b"]
    return ss2[:, :, None, None] * yn + sh2[:, :, None, None]


if __name__ == "__main__":
    B, Cin, Cout, H, W_sp, WD = 2, 4, 8, 16, 16, 32
    ks = jax.random.split(jax.random.PRNGKey(0), 12)

    x = jax.random.normal(ks[0], (B, Cin, H, W_sp), jnp.float32)
    w_lat = jax.random.normal(ks[1], (B, WD), jnp.float32)
    # torch.randn noise inside forward -> generated host-side and passed in (b,1,h,w)
    noise1 = jax.random.normal(ks[2], (B, 1, H, W_sp), jnp.float32)
    noise2 = jax.random.normal(ks[3], (B, 1, H, W_sp), jnp.float32)

    params = {
        # NoiceChannel: Parameter ~ N(0,1) then * 0.01
        "nw1": jax.random.normal(ks[4], (Cin,), jnp.float32) * 0.01,
        "nw2": jax.random.normal(ks[5], (Cout,), jnp.float32) * 0.01,
        # EqualizedConv: weight ~ N(0,1) (OIHW), bias = 0
        "conv_w": jax.random.normal(ks[6], (Cout, Cin, 3, 3), jnp.float32),
        "conv_b": jnp.zeros((Cout,), jnp.float32),
        # EqualizedLinear: weight stored as (in, out), bias = 0
        "s1w": jax.random.normal(ks[7], (WD, Cin), jnp.float32),
        "s1b": jnp.zeros((Cin,), jnp.float32),
        "t1w": jax.random.normal(ks[8], (WD, Cin), jnp.float32),
        "t1b": jnp.zeros((Cin,), jnp.float32),
        "s2w": jax.random.normal(ks[9], (WD, Cout), jnp.float32),
        "s2b": jnp.zeros((Cout,), jnp.float32),
        "t2w": jax.random.normal(ks[10], (WD, Cout), jnp.float32),
        "t2b": jnp.zeros((Cout,), jnp.float32),
    }

    kp = prepare_params(params, H, W_sp, WD)   # one-time weight repack / scale fold

    out = generator_cell(x, w_lat, noise1, noise2, kp)
    out = jax.block_until_ready(out)

    ref = reference(x, w_lat, noise1, noise2, params)
    np.testing.assert_allclose(np.asarray(out), np.asarray(ref), rtol=2e-2, atol=2e-2)

    print("KERNEL_OK")
</pallas_src>

<mosaic_0001>
module attributes {stable_mosaic.version = 11 : i64} {
  func.func @_generator_cell_kernel(%arg0: i32, %arg1: memref<1x8x256xf32, #tpu.memory_space<vmem>>, %arg2: memref<1x1x256xf32, #tpu.memory_space<vmem>>, %arg3: memref<1x1x256xf32, #tpu.memory_space<vmem>>, %arg4: memref<1x32x1xf32, #tpu.memory_space<vmem>>, %arg5: memref<9x256xf32, #tpu.memory_space<vmem>>, %arg6: memref<8x1xf32, #tpu.memory_space<vmem>>, %arg7: memref<8x1xf32, #tpu.memory_space<vmem>>, %arg8: memref<8x72xf32, #tpu.memory_space<vmem>>, %arg9: memref<8x1xf32, #tpu.memory_space<vmem>>, %arg10: memref<1x8x256xf32, #tpu.memory_space<vmem>>, %arg11: memref<72x256xf32, #tpu.memory_space<vmem>>) attributes {dimension_semantics = [#tpu.dimension_semantics<parallel>], iteration_bounds = array<i64: 2>, scalar_prefetch = 0 : i64, scratch_operands = 1 : i64, tpu.core_type = #tpu.core_type<tc>, window_params = [{transform_indices = @transform_0, window_bounds = array<i64: 1, 8, 256>}, {transform_indices = @transform_1, window_bounds = array<i64: 1, 1, 256>}, {transform_indices = @transform_2, window_bounds = array<i64: 1, 1, 256>}, {transform_indices = @transform_3, window_bounds = array<i64: 1, 32, 1>}, {pipeline_mode = #tpu.pipeline_mode<synchronous>, transform_indices = @transform_4, window_bounds = array<i64: 9, 256>}, {pipeline_mode = #tpu.pipeline_mode<synchronous>, transform_indices = @transform_5, window_bounds = array<i64: 8, 1>}, {pipeline_mode = #tpu.pipeline_mode<synchronous>, transform_indices = @transform_6, window_bounds = array<i64: 8, 1>}, {pipeline_mode = #tpu.pipeline_mode<synchronous>, transform_indices = @transform_7, window_bounds = array<i64: 8, 72>}, {pipeline_mode = #tpu.pipeline_mode<synchronous>, transform_indices = @transform_8, window_bounds = array<i64: 8, 1>}, {transform_indices = @transform_9, window_bounds = array<i64: 1, 8, 256>}]} {
    %c0 = arith.constant 0 : index
    %c0_0 = arith.constant 0 : index
    %c0_1 = arith.constant 0 : index
    %0 = vector.load %arg1[%c0, %c0_0, %c0_1] : memref<1x8x256xf32, #tpu.memory_space<vmem>>, vector<1x8x256xf32>
    %1 = vector.shape_cast %0 : vector<1x8x256xf32> to vector<8x256xf32>
    %c0_2 = arith.constant 0 : index
    %c0_3 = arith.constant 0 : index
    %c0_4 = arith.constant 0 : index
    %2 = vector.load %arg2[%c0_2, %c0_3, %c0_4] : memref<1x1x256xf32, #tpu.memory_space<vmem>>, vector<1x1x256xf32>
    %3 = vector.shape_cast %2 : vector<1x1x256xf32> to vector<1x256xf32>
    %c0_5 = arith.constant 0 : index
    %c0_6 = arith.constant 0 : index
    %c0_7 = arith.constant 0 : index
    %4 = vector.load %arg3[%c0_5, %c0_6, %c0_7] : memref<1x1x256xf32, #tpu.memory_space<vmem>>, vector<1x1x256xf32>
    %5 = vector.shape_cast %4 : vector<1x1x256xf32> to vector<1x256xf32>
    %c0_8 = arith.constant 0 : index
    %c0_9 = arith.constant 0 : index
    %c0_10 = arith.constant 0 : index
    %6 = vector.load %arg4[%c0_8, %c0_9, %c0_10] : memref<1x32x1xf32, #tpu.memory_space<vmem>>, vector<1x8x1xf32>
    %7 = vector.shape_cast %6 : vector<1x8x1xf32> to vector<8x1xf32>
    %c0_11 = arith.constant 0 : index
    %c8 = arith.constant 8 : index
    %c0_12 = arith.constant 0 : index
    %8 = vector.load %arg4[%c0_11, %c8, %c0_12] : memref<1x32x1xf32, #tpu.memory_space<vmem>>, vector<1x8x1xf32>
    %9 = vector.shape_cast %8 : vector<1x8x1xf32> to vector<8x1xf32>
    %c0_13 = arith.constant 0 : index
    %c16 = arith.constant 16 : index
    %c0_14 = arith.constant 0 : index
    %10 = vector.load %arg4[%c0_13, %c16, %c0_14] : memref<1x32x1xf32, #tpu.memory_space<vmem>>, vector<1x8x1xf32>
    %11 = vector.shape_cast %10 : vector<1x8x1xf32> to vector<8x1xf32>
    %c0_15 = arith.constant 0 : index
    %c24 = arith.constant 24 : index
    %c0_16 = arith.constant 0 : index
    %12 = vector.load %arg4[%c0_15, %c24, %c0_16] : memref<1x32x1xf32, #tpu.memory_space<vmem>>, vector<1x8x1xf32>
    %13 = vector.shape_cast %12 : vector<1x8x1xf32> to vector<8x1xf32>
    %c0_17 = arith.constant 0 : index
    %c0_18 = arith.constant 0 : index
    %14 = vector.load %arg6[%c0_17, %c0_18] : memref<8x1xf32, #tpu.memory_space<vmem>>, vector<8x1xf32>
    %15 = vector.broadcast %14 : vector<8x1xf32> to vector<8x256xf32>
    %16 = vector.broadcast %3 : vector<1x256xf32> to vector<8x256xf32>
    %17 = arith.mulf %15, %16 : vector<8x256xf32>
    %18 = arith.addf %1, %17 : vector<8x256xf32>
    %cst = arith.constant dense<0.000000e+00> : vector<8xf32>
    %19 = vector.multi_reduction <add>, %18, %cst [1] : vector<8x256xf32> to vector<8xf32>
    %20 = vector.shape_cast %19 : vector<8xf32> to vector<8x1xf32>
    %cst_19 = arith.constant 2.560000e+02 : f32
    %21 = vector.broadcast %cst_19 : f32 to vector<8x1xf32>
    %22 = arith.divf %20, %21 : vector<8x1xf32>
    %23 = arith.mulf %18, %18 : vector<8x256xf32>
    %cst_20 = arith.constant dense<0.000000e+00> : vector<8xf32>
    %24 = vector.multi_reduction <add>, %23, %cst_20 [1] : vector<8x256xf32> to vector<8xf32>
    %25 = vector.shape_cast %24 : vector<8xf32> to vector<8x1xf32>
    %cst_21 = arith.constant 2.560000e+02 : f32
    %26 = vector.broadcast %cst_21 : f32 to vector<8x1xf32>
    %27 = arith.divf %25, %26 : vector<8x1xf32>
    %28 = arith.mulf %22, %22 : vector<8x1xf32>
    %29 = arith.subf %27, %28 : vector<8x1xf32>
    %cst_22 = arith.constant 9.99999974E-6 : f32
    %30 = vector.broadcast %cst_22 : f32 to vector<8x1xf32>
    %31 = arith.addf %29, %30 : vector<8x1xf32>
    %32 = math.rsqrt %31 : vector<8x1xf32>
    %33 = arith.mulf %7, %32 : vector<8x1xf32>
    %34 = arith.mulf %33, %22 : vector<8x1xf32>
    %35 = arith.subf %9, %34 : vector<8x1xf32>
    %36 = vector.broadcast %33 : vector<8x1xf32> to vector<8x256xf32>
    %37 = arith.mulf %36, %18 : vector<8x256xf32>
    %38 = vector.broadcast %35 : vector<8x1xf32> to vector<8x256xf32>
    %39 = arith.addf %37, %38 : vector<8x256xf32>
    %c17_i32 = arith.constant 17 : i32
    %40 = tpu.dynamic_rotate %39 by %c17_i32 dim 1 : vector<8x256xf32>, i32 -> vector<8x256xf32>
    %c0_23 = arith.constant 0 : index
    %c0_24 = arith.constant 0 : index
    %41 = vector.load %arg5[%c0_23, %c0_24] : memref<9x256xf32, #tpu.memory_space<vmem>>, vector<1x256xf32>
    %42 = vector.broadcast %41 : vector<1x256xf32> to vector<8x256xf32>
    %43 = arith.mulf %40, %42 : vector<8x256xf32>
    %c0_25 = arith.constant 0 : index
    %c0_26 = arith.constant 0 : index
    %44 = vector.load %arg11[%c0_25, %c0_26] : memref<72x256xf32, #tpu.memory_space<vmem>>, vector<8x256xf32>
    tpu.vector_store %arg11[%c0_25, %c0_26], %43 {strides = array<i32>} : memref<72x256xf32, #tpu.memory_space<vmem>>, vector<8x256xf32>,
    %c16_i32 = arith.constant 16 : i32
    %45 = tpu.dynamic_rotate %39 by %c16_i32 dim 1 : vector<8x256xf32>, i32 -> vector<8x256xf32>
    %c1 = arith.constant 1 : index
    %c0_27 = arith.constant 0 : index
    %46 = vector.load %arg5[%c1, %c0_27] : memref<9x256xf32, #tpu.memory_space<vmem>>, vector<1x256xf32>
    %47 = vector.broadcast %46 : vector<1x256xf32> to vector<8x256xf32>
    %48 = arith.mulf %45, %47 : vector<8x256xf32>
    %c8_28 = arith.constant 8 : index
    %c0_29 = arith.constant 0 : index
    %49 = vector.load %arg11[%c8_28, %c0_29] : memref<72x256xf32, #tpu.memory_space<vmem>>, vector<8x256xf32>
    tpu.vector_store %arg11[%c8_28, %c0_29], %48 {strides = array<i32>} : memref<72x256xf32, #tpu.memory_space<vmem>>, vector<8x256xf32>,
    %c15_i32 = arith.constant 15 : i32
    %50 = tpu.dynamic_rotate %39 by %c15_i32 dim 1 : vector<8x256xf32>, i32 -> vector<8x256xf32>
    %c2 = arith.constant 2 : index
    %c0_30 = arith.constant 0 : index
    %51 = vector.load %arg5[%c2, %c0_30] : memref<9x256xf32, #tpu.memory_space<vmem>>, vector<1x256xf32>
    %52 = vector.broadcast %51 : vector<1x256xf32> to vector<8x256xf32>
    %53 = arith.mulf %50, %52 : vector<8x256xf32>
    %c16_31 = arith.constant 16 : index
    %c0_32 = arith.constant 0 : index
    %54 = vector.load %arg11[%c16_31, %c0_32] : memref<72x256xf32, #tpu.memory_space<vmem>>, vector<8x256xf32>
    tpu.vector_store %arg11[%c16_31, %c0_32], %53 {strides = array<i32>} : memref<72x256xf32, #tpu.memory_space<vmem>>, vector<8x256xf32>,
    %c1_i32 = arith.constant 1 : i32
    %55 = tpu.dynamic_rotate %39 by %c1_i32 dim 1 : vector<8x256xf32>, i32 -> vector<8x256xf32>
    %c3 = arith.constant 3 : index
    %c0_33 = arith.constant 0 : index
    %56 = vector.load %arg5[%c3, %c0_33] : memref<9x256xf32, #tpu.memory_space<vmem>>, vector<1x256xf32>
    %57 = vector.broadcast %56 : vector<1x256xf32> to vector<8x256xf32>
    %58 = arith.mulf %55, %57 : vector<8x256xf32>
    %c24_34 = arith.constant 24 : index
    %c0_35 = arith.constant 0 : index
    %59 = vector.load %arg11[%c24_34, %c0_35] : memref<72x256xf32, #tpu.memory_space<vmem>>, vector<8x256xf32>
    tpu.vector_store %arg11[%c24_34, %c0_35], %58 {strides = array<i32>} : memref<72x256xf32, #tpu.memory_space<vmem>>, vector<8x256xf32>,
    %c32 = arith.constant 32 : index
    %c0_36 = arith.constant 0 : index
    %60 = vector.load %arg11[%c32, %c0_36] : memref<72x256xf32, #tpu.memory_space<vmem>>, vector<8x256xf32>
    tpu.vector_store %arg11[%c32, %c0_36], %39 {strides = array<i32>} : memref<72x256xf32, #tpu.memory_space<vmem>>, vector<8x256xf32>,
    %c255_i32 = arith.constant 255 : i32
    %61 = tpu.dynamic_rotate %39 by %c255_i32 dim 1 : vector<8x256xf32>, i32 -> vector<8x256xf32>
    %c5 = arith.constant 5 : index
    %c0_37 = arith.constant 0 : index
    %62 = vector.load %arg5[%c5, %c0_37] : memref<9x256xf32, #tpu.memory_space<vmem>>, vector<1x256xf32>
    %63 = vector.broadcast %62 : vector<1x256xf32> to vector<8x256xf32>
    %64 = arith.mulf %61, %63 : vector<8x256xf32>
    %c40 = arith.constant 40 : index
    %c0_38 = arith.constant 0 : index
    %65 = vector.load %arg11[%c40, %c0_38] : memref<72x256xf32, #tpu.memory_space<vmem>>, vector<8x256xf32>
    tpu.vector_store %arg11[%c40, %c0_38], %64 {strides = array<i32>} : memref<72x256xf32, #tpu.memory_space<vmem>>, vector<8x256xf32>,
    %c241_i32 = arith.constant 241 : i32
    %66 = tpu.dynamic_rotate %39 by %c241_i32 dim 1 : vector<8x256xf32>, i32 -> vector<8x256xf32>
    %c6 = arith.constant 6 : index
    %c0_39 = arith.constant 0 : index
    %67 = vector.load %arg5[%c6, %c0_39] : memref<9x256xf32, #tpu.memory_space<vmem>>, vector<1x256xf32>
    %68 = vector.broadcast %67 : vector<1x256xf32> to vector<8x256xf32>
    %69 = arith.mulf %66, %68 : vector<8x256xf32>
    %c48 = arith.constant 48 : index
    %c0_40 = arith.constant 0 : index
    %70 = vector.load %arg11[%c48, %c0_40] : memref<72x256xf32, #tpu.memory_space<vmem>>, vector<8x256xf32>
    tpu.vector_store %arg11[%c48, %c0_40], %69 {strides = array<i32>} : memref<72x256xf32, #tpu.memory_space<vmem>>, vector<8x256xf32>,
    %c240_i32 = arith.constant 240 : i32
    %71 = tpu.dynamic_rotate %39 by %c240_i32 dim 1 : vector<8x256xf32>, i32 -> vector<8x256xf32>
    %c7 = arith.constant 7 : index
    %c0_41 = arith.constant 0 : index
    %72 = vector.load %arg5[%c7, %c0_41] : memref<9x256xf32, #tpu.memory_space<vmem>>, vector<1x256xf32>
    %73 = vector.broadcast %72 : vector<1x256xf32> to vector<8x256xf32>
    %74 = arith.mulf %71, %73 : vector<8x256xf32>
    %c56 = arith.constant 56 : index
    %c0_42 = arith.constant 0 : index
    %75 = vector.load %arg11[%c56, %c0_42] : memref<72x256xf32, #tpu.memory_space<vmem>>, vector<8x256xf32>
    tpu.vector_store %arg11[%c56, %c0_42], %74 {strides = array<i32>} : memref<72x256xf32, #tpu.memory_space<vmem>>, vector<8x256xf32>,
    %c239_i32 = arith.constant 239 : i32
    %76 = tpu.dynamic_rotate %39 by %c239_i32 dim 1 : vector<8x256xf32>, i32 -> vector<8x256xf32>
    %c8_43 = arith.constant 8 : index
    %c0_44 = arith.constant 0 : index
    %77 = vector.load %arg5[%c8_43, %c0_44] : memref<9x256xf32, #tpu.memory_space<vmem>>, vector<1x256xf32>
    %78 = vector.broadcast %77 : vector<1x256xf32> to vector<8x256xf32>
    %79 = arith.mulf %76, %78 : vector<8x256xf32>
    %c64 = arith.constant 64 : index
    %c0_45 = arith.constant 0 : index
    %80 = vector.load %arg11[%c64, %c0_45] : memref<72x256xf32, #tpu.memory_space<vmem>>, vector<8x256xf32>
    tpu.vector_store %arg11[%c64, %c0_45], %79 {strides = array<i32>} : memref<72x256xf32, #tpu.memory_space<vmem>>, vector<8x256xf32>,
    %c0_46 = arith.constant 0 : index
    %c0_47 = arith.constant 0 : index
    %81 = vector.load %arg8[%c0_46, %c0_47] : memref<8x72xf32, #tpu.memory_space<vmem>>, vector<8x72xf32>
    %c0_48 = arith.constant 0 : index
    %c0_49 = arith.constant 0 : index
    %82 = vector.load %arg11[%c0_48, %c0_49] : memref<72x256xf32, #tpu.memory_space<vmem>>, vector<72x256xf32>
    %cst_50 = arith.constant dense<0.000000e+00> : vector<8x256xf32>
    %83 = tpu.matmul %81, %82, %cst_50 {dimension_numbers = #tpu.dot_dimension_numbers<[1], [0], [0], [1], [0, 0, 1, 1], [], []>} : vector<8x72xf32>, vector<72x256xf32>, vector<8x256xf32> -> vector<8x256xf32>
    %c0_51 = arith.constant 0 : index
    %c0_52 = arith.constant 0 : index
    %84 = vector.load %arg9[%c0_51, %c0_52] : memref<8x1xf32, #tpu.memory_space<vmem>>, vector<8x1xf32>
    %85 = vector.broadcast %84 : vector<8x1xf32> to vector<8x256xf32>
    %86 = arith.addf %83, %85 : vector<8x256xf32>
    %87 = arith.mulf %86, %86 : vector<8x256xf32>
    %cst_53 = arith.constant dense<0.000000e+00> : vector<256xf32>
    %88 = vector.multi_reduction <add>, %87, %cst_53 [0] : vector<8x256xf32> to vector<256xf32>
    %89 = vector.shape_cast %88 : vector<256xf32> to vector<1x256xf32>
    %cst_54 = arith.constant 1.250000e-01 : f32
    %90 = vector.broadcast %cst_54 : f32 to vector<1x256xf32>
    %91 = arith.mulf %89, %90 : vector<1x256xf32>
    %cst_55 = arith.constant 9.99999993E-9 : f32
    %92 = vector.broadcast %cst_55 : f32 to vector<1x256xf32>
    %93 = arith.addf %91, %92 : vector<1x256xf32>
    %94 = math.rsqrt %93 : vector<1x256xf32>
    %95 = vector.broadcast %94 : vector<1x256xf32> to vector<8x256xf32>
    %96 = arith.mulf %86, %95 : vector<8x256xf32>
    %cst_56 = arith.constant 0.000000e+00 : f32
    %97 = vector.broadcast %cst_56 : f32 to vector<8x256xf32>
    %98 = arith.cmpf ogt, %96, %97 : vector<8x256xf32>
    %cst_57 = arith.constant 2.000000e-01 : f32
    %99 = vector.broadcast %cst_57 : f32 to vector<8x256xf32>
    %100 = arith.mulf %99, %96 : vector<8x256xf32>
    %101 = arith.select %98, %96, %100 : vector<8x256xi1>, vector<8x256xf32>
    %c0_58 = arith.constant 0 : index
    %c0_59 = arith.constant 0 : index
    %102 = vector.load %arg7[%c0_58, %c0_59] : memref<8x1xf32, #tpu.memory_space<vmem>>, vector<8x1xf32>
    %103 = vector.broadcast %102 : vector<8x1xf32> to vector<8x256xf32>
    %104 = vector.broadcast %5 : vector<1x256xf32> to vector<8x256xf32>
    %105 = arith.mulf %103, %104 : vector<8x256xf32>
    %106 = arith.addf %101, %105 : vector<8x256xf32>
    %cst_60 = arith.constant dense<0.000000e+00> : vector<8xf32>
    %107 = vector.multi_reduction <add>, %106, %cst_60 [1] : vector<8x256xf32> to vector<8xf32>
    %108 = vector.shape_cast %107 : vector<8xf32> to vector<8x1xf32>
    %cst_61 = arith.constant 2.560000e+02 : f32
    %109 = vector.broadcast %cst_61 : f32 to vector<8x1xf32>
    %110 = arith.divf %108, %109 : vector<8x1xf32>
    %111 = arith.mulf %106, %106 : vector<8x256xf32>
    %cst_62 = arith.constant dense<0.000000e+00> : vector<8xf32>
    %112 = vector.multi_reduction <add>, %111, %cst_62 [1] : vector<8x256xf32> to vector<8xf32>
    %113 = vector.shape_cast %112 : vector<8xf32> to vector<8x1xf32>
    %cst_63 = arith.constant 2.560000e+02 : f32
    %114 = vector.broadcast %cst_63 : f32 to vector<8x1xf32>
    %115 = arith.divf %113, %114 : vector<8x1xf32>
    %116 = arith.mulf %110, %110 : vector<8x1xf32>
    %117 = arith.subf %115, %116 : vector<8x1xf32>
    %cst_64 = arith.constant 9.99999974E-6 : f32
    %118 = vector.broadcast %cst_64 : f32 to vector<8x1xf32>
    %119 = arith.addf %117, %118 : vector<8x1xf32>
    %120 = math.rsqrt %119 : vector<8x1xf32>
    %121 = arith.mulf %11, %120 : vector<8x1xf32>
    %122 = arith.mulf %121, %110 : vector<8x1xf32>
    %123 = arith.subf %13, %122 : vector<8x1xf32>
    %124 = vector.broadcast %121 : vector<8x1xf32> to vector<8x256xf32>
    %125 = arith.mulf %124, %106 : vector<8x256xf32>
    %126 = vector.broadcast %123 : vector<8x1xf32> to vector<8x256xf32>
    %127 = arith.addf %125, %126 : vector<8x256xf32>
    %c0_65 = arith.constant 0 : index
    %c0_66 = arith.constant 0 : index
    %c0_67 = arith.constant 0 : index
    %128 = vector.load %arg10[%c0_65, %c0_66, %c0_67] : memref<1x8x256xf32, #tpu.memory_space<vmem>>, vector<1x8x256xf32>
    %129 = vector.shape_cast %128 : vector<1x8x256xf32> to vector<8x256xf32>
    %130 = vector.shape_cast %127 : vector<8x256xf32> to vector<1x8x256xf32>
    tpu.vector_store %arg10[%c0_65, %c0_66, %c0_67], %130 {strides = array<i32>} : memref<1x8x256xf32, #tpu.memory_space<vmem>>, vector<1x8x256xf32>,
    return
  }
  func.func @transform_0(%arg0: i32) -> (i32, i32, i32) {
    %c0_i32 = arith.constant 0 : i32
    %c0_i32_0 = arith.constant 0 : i32
    %c0_i32_1 = arith.constant 0 : i32
    return %arg0, %c0_i32, %c0_i32_0 : i32, i32, i32
  }
  func.func @transform_1(%arg0: i32) -> (i32, i32, i32) {
    %c0_i32 = arith.constant 0 : i32
    %c0_i32_0 = arith.constant 0 : i32
    %c0_i32_1 = arith.constant 0 : i32
    return %arg0, %c0_i32, %c0_i32_0 : i32, i32, i32
  }
  func.func @transform_2(%arg0: i32) -> (i32, i32, i32) {
    %c0_i32 = arith.constant 0 : i32
    %c0_i32_0 = arith.constant 0 : i32
    %c0_i32_1 = arith.constant 0 : i32
    return %arg0, %c0_i32, %c0_i32_0 : i32, i32, i32
  }
  func.func @transform_3(%arg0: i32) -> (i32, i32, i32) {
    %c0_i32 = arith.constant 0 : i32
    %c0_i32_0 = arith.constant 0 : i32
    %c0_i32_1 = arith.constant 0 : i32
    return %arg0, %c0_i32, %c0_i32_0 : i32, i32, i32
  }
  func.func @transform_4(%arg0: i32) -> (i32, i32) {
    %c0_i32 = arith.constant 0 : i32
    %c0_i32_0 = arith.constant 0 : i32
    %c0_i32_1 = arith.constant 0 : i32
    return %c0_i32, %c0_i32_0 : i32, i32
  }
  func.func @transform_5(%arg0: i32) -> (i32, i32) {
    %c0_i32 = arith.constant 0 : i32
    %c0_i32_0 = arith.constant 0 : i32
    %c0_i32_1 = arith.constant 0 : i32
    return %c0_i32, %c0_i32_0 : i32, i32
  }
  func.func @transform_6(%arg0: i32) -> (i32, i32) {
    %c0_i32 = arith.constant 0 : i32
    %c0_i32_0 = arith.constant 0 : i32
    %c0_i32_1 = arith.constant 0 : i32
    return %c0_i32, %c0_i32_0 : i32, i32
  }
  func.func @transform_7(%arg0: i32) -> (i32, i32) {
    %c0_i32 = arith.constant 0 : i32
    %c0_i32_0 = arith.constant 0 : i32
    %c0_i32_1 = arith.constant 0 : i32
    return %c0_i32, %c0_i32_0 : i32, i32
  }
  func.func @transform_8(%arg0: i32) -> (i32, i32) {
    %c0_i32 = arith.constant 0 : i32
    %c0_i32_0 = arith.constant 0 : i32
    %c0_i32_1 = arith.constant 0 : i32
    return %c0_i32, %c0_i32_0 : i32, i32
  }
  func.func @transform_9(%arg0: i32) -> (i32, i32, i32) {
    %c0_i32 = arith.constant 0 : i32
    %c0_i32_0 = arith.constant 0 : i32
    %c0_i32_1 = arith.constant 0 : i32
    return %arg0, %c0_i32, %c0_i32_0 : i32, i32, i32
  }
}

</mosaic_0001>

<llo_original>
// kernel: tpu_custom_call.1
$region0: #{tpu_custom_call.1}
  #allocation0 [shape = 'u32[]', space=smem, size = 0x4, offset = 0x4, fixed_abs, tag = 'smem constant byte address 0x4 - core index']
  #allocation1 [shape = 'u32[144,128]{1,0:T(1,128)}', space=vmem, size = 0x12000, scoped, tag = 'internal scratch']
  #allocation2 [shape = 'f32[72,256]{1,0:T(8,128)}', space=vmem, size = 0x12000, scoped, tag = 'scratch operand']
  %s0 = inlined_call_operand.vmem [shape: f32[2,8,256], index: 0, kind: input, shape index: {}]
  %s1 = inlined_call_operand.vmem [shape: f32[2,1,256], index: 1, kind: input, shape index: {}]
  %s2 = inlined_call_operand.vmem [shape: f32[2,1,256], index: 2, kind: input, shape index: {}]
  %s3 = inlined_call_operand.vmem [shape: f32[2,32,1], index: 3, kind: input, shape index: {}]
  %s4 = inlined_call_operand.vmem [shape: f32[9,256], index: 4, kind: input, shape index: {}]
  %s5 = inlined_call_operand.vmem [shape: f32[8,1], index: 5, kind: input, shape index: {}]
  %s6 = inlined_call_operand.vmem [shape: f32[8,1], index: 6, kind: input, shape index: {}]
  %s7 = inlined_call_operand.vmem [shape: f32[8,72], index: 7, kind: input, shape index: {}]
  %s8 = inlined_call_operand.vmem [shape: f32[8,1], index: 8, kind: input, shape index: {}]
  %s9 = inlined_call_operand.hbm [shape: f32[2,8,256], index: 9, kind: output, shape index: {}]
  %s10 = sld [smem:[#allocation0]]
  $region69: #{tpu_custom_call.1} parent=0
    _
  %s12 = ssub.s32 1, %s10
  %s13 = scalar_select 0, %s12, %s10
  $region1: #{tpu_custom_call.1} parent=0
    #allocation3 [shape = 'u8[16384]{0}', space=vmem, size = 0x4000, scoped, tag = 'output window, operand 0']
    #allocation4 [shape = 's32[2]{0}', space=sflag, size = 0x8, scoped, tag = 'scoped memory for tpu_custom_call.1']
    %14 = vsyncpa [#allocation4], 0
    %s15 = scalar_lea.sflag [#allocation4], 1
    %16 = vsyncpa %s15, 0
    loop: start=0, step=1, limit=4
    $region2: #{tpu_custom_call.1} parent=1 // loop_pre_header
      _
    $region3: #{tpu_custom_call.1} parent=1 // loop_header
      %s18 = sphi 0, %s22
      %p19 = scmp.ge.s32.totalorder %s18, 4
      %s28 = sphi 0, %s30
      %s31 = sphi 0, %s28
      %s32 = sphi 0, %s31
      %s48 = sphi 0, %s32
      %s54 = sphi 0, %s56
      %s57 = sphi 0, %s54
      %s58 = sphi 0, %s57
      %s74 = sphi 0, %s58
      %s80 = sphi 0, %s82
      %s83 = sphi 0, %s80
      %s84 = sphi 0, %s83
      %s100 = sphi 0, %s84
      %s106 = sphi 0, %s108
      %s109 = sphi 0, %s106
      %s110 = sphi 0, %s109
      %s126 = sphi 0, %s110
      %s130 = sphi 0, %s130
      %s132 = sphi 0, %s130
      %s133 = sphi 0, %s132
      %s147 = sphi 0, %s133
      %s151 = sphi 0, %s151
      %s153 = sphi 0, %s151
      %s154 = sphi 0, %s153
      %s168 = sphi 0, %s154
      %s172 = sphi 0, %s172
      %s174 = sphi 0, %s172
      %s175 = sphi 0, %s174
      %s189 = sphi 0, %s175
      %s193 = sphi 0, %s193
      %s195 = sphi 0, %s193
      %s196 = sphi 0, %s195
      %s210 = sphi 0, %s196
      %s214 = sphi 0, %s214
      %s216 = sphi 0, %s214
      %s217 = sphi 0, %s216
      %s231 = sphi 0, %s217
      %s237 = sphi 0, %s239
      %s240 = sphi 0, %s237
      %s241 = sphi 0, %s240
      %s257 = sphi 0, %s241
    $region4: #{tpu_custom_call.1} parent=1 // loop_header_branch
      %21 = sbr.rel (%p19) target = $region8
    $region5: #{tpu_custom_call.1} parent=1 // loop_body
      %s23 = ssub.s32 %s18, 1
      %s24 = ssub.s32 %s18, 2
      %s25 = sadd.s32 %s18, 1
      %s26 = ssub.s32 %s18, %s25
      %p27 = scmp.eq.s32.totalorder %s26, 0
      %s29 = sadd.s32 %s28, 1
      %s30 = scalar_select %p27, %s28, %s29
      %p33 = pneg %p27
      %p34 = scmp.eq.s32.totalorder %s18, 1
      %p35 = por %p33, %p34
      %p36 = scmp.ne.s32.totalorder %s28, %s31
      %p37 = scmp.eq.s32.totalorder %s18, 0
      %p38 = por %p36, %p37
      %p39 = scmp.ne.s32.totalorder %s28, %s31
      %p40 = scmp.eq.s32.totalorder %s23, 1
      %p41 = por %p39, %p40
      %p42 = scmp.ne.s32.totalorder %s31, %s32
      %p43 = scmp.eq.s32.totalorder %s23, 0
      %p44 = por %p42, %p43
      %p45 = scmp.ne.s32.totalorder %s31, %s32
      %p46 = scmp.eq.s32.totalorder %s24, 1
      %p47 = por %p45, %p46
      %p49 = scmp.ne.s32.totalorder %s32, %s48
      %p50 = scmp.eq.s32.totalorder %s24, 0
      %p51 = por %p49, %p50
      %s52 = ssub.s32 %s18, %s25
      %p53 = scmp.eq.s32.totalorder %s52, 0
      %s55 = sadd.s32 %s54, 1
      %s56 = scalar_select %p53, %s54, %s55
      %p59 = pneg %p53
      %p60 = scmp.eq.s32.totalorder %s18, 1
      %p61 = por %p59, %p60
      %p62 = scmp.ne.s32.totalorder %s54, %s57
      %p63 = scmp.eq.s32.totalorder %s18, 0
      %p64 = por %p62, %p63
      %p65 = scmp.ne.s32.totalorder %s54, %s57
      %p66 = scmp.eq.s32.totalorder %s23, 1
      %p67 = por %p65, %p66
      %p68 = scmp.ne.s32.totalorder %s57, %s58
      %p69 = scmp.eq.s32.totalorder %s23, 0
      %p70 = por %p68, %p69
      %p71 = scmp.ne.s32.totalorder %s57, %s58
      %p72 = scmp.eq.s32.totalorder %s24, 1
      %p73 = por %p71, %p72
      %p75 = scmp.ne.s32.totalorder %s58, %s74
      %p76 = scmp.eq.s32.totalorder %s24, 0
      %p77 = por %p75, %p76
      %s78 = ssub.s32 %s18, %s25
      %p79 = scmp.eq.s32.totalorder %s78, 0
      %s81 = sadd.s32 %s80, 1
      %s82 = scalar_select %p79, %s80, %s81
      %p85 = pneg %p79
      %p86 = scmp.eq.s32.totalorder %s18, 1
      %p87 = por %p85, %p86
      %p88 = scmp.ne.s32.totalorder %s80, %s83
      %p89 = scmp.eq.s32.totalorder %s18, 0
      %p90 = por %p88, %p89
      %p91 = scmp.ne.s32.totalorder %s80, %s83
      %p92 = scmp.eq.s32.totalorder %s23, 1
      %p93 = por %p91, %p92
      %p94 = scmp.ne.s32.totalorder %s83, %s84
      %p95 = scmp.eq.s32.totalorder %s23, 0
      %p96 = por %p94, %p95
      %p97 = scmp.ne.s32.totalorder %s83, %s84
      %p98 = scmp.eq.s32.totalorder %s24, 1
      %p99 = por %p97, %p98
      %p101 = scmp.ne.s32.totalorder %s84, %s100
      %p102 = scmp.eq.s32.totalorder %s24, 0
      %p103 = por %p101, %p102
      %s104 = ssub.s32 %s18, %s25
      %p105 = scmp.eq.s32.totalorder %s104, 0
      %s107 = sadd.s32 %s106, 1
      %s108 = scalar_select %p105, %s106, %s107
      %p111 = pneg %p105
      %p112 = scmp.eq.s32.totalorder %s18, 1
      %p113 = por %p111, %p112
      %p114 = scmp.ne.s32.totalorder %s106, %s109
      %p115 = scmp.eq.s32.totalorder %s18, 0
      %p116 = por %p114, %p115
      %p117 = scmp.ne.s32.totalorder %s106, %s109
      %p118 = scmp.eq.s32.totalorder %s23, 1
      %p119 = por %p117, %p118
      %p120 = scmp.ne.s32.totalorder %s109, %s110
      %p121 = scmp.eq.s32.totalorder %s23, 0
      %p122 = por %p120, %p121
      %p123 = scmp.ne.s32.totalorder %s109, %s110
      %p124 = scmp.eq.s32.totalorder %s24, 1
      %p125 = por %p123, %p124
      %p127 = scmp.ne.s32.totalorder %s110, %s126
      %p128 = scmp.eq.s32.totalorder %s24, 0
      %p129 = por %p127, %p128
      %s131 = sadd.s32 %s130, 1
      %p134 = scmp.eq.s32.totalorder %s18, 1
      %p135 = scmp.ne.s32.totalorder %s130, %s132
      %p136 = scmp.eq.s32.totalorder %s18, 0
      %p137 = por %p135, %p136
      %p138 = scmp.ne.s32.totalorder %s130, %s132
      %p139 = scmp.eq.s32.totalorder %s23, 1
      %p140 = por %p138, %p139
      %p141 = scmp.ne.s32.totalorder %s132, %s133
      %p142 = scmp.eq.s32.totalorder %s23, 0
      %p143 = por %p141, %p142
      %p144 = scmp.ne.s32.totalorder %s132, %s133
      %p145 = scmp.eq.s32.totalorder %s24, 1
      %p146 = por %p144, %p145
      %p148 = scmp.ne.s32.totalorder %s133, %s147
      %p149 = scmp.eq.s32.totalorder %s24, 0
      %p150 = por %p148, %p149
      %s152 = sadd.s32 %s151, 1
      %p155 = scmp.eq.s32.totalorder %s18, 1
      %p156 = scmp.ne.s32.totalorder %s151, %s153
      %p157 = scmp.eq.s32.totalorder %s18, 0
      %p158 = por %p156, %p157
      %p159 = scmp.ne.s32.totalorder %s151, %s153
      %p160 = scmp.eq.s32.totalorder %s23, 1
      %p161 = por %p159, %p160
      %p162 = scmp.ne.s32.totalorder %s153, %s154
      %p163 = scmp.eq.s32.totalorder %s23, 0
      %p164 = por %p162, %p163
      %p165 = scmp.ne.s32.totalorder %s153, %s154
      %p166 = scmp.eq.s32.totalorder %s24, 1
      %p167 = por %p165, %p166
      %p169 = scmp.ne.s32.totalorder %s154, %s168
      %p170 = scmp.eq.s32.totalorder %s24, 0
      %p171 = por %p169, %p170
      %s173 = sadd.s32 %s172, 1
      %p176 = scmp.eq.s32.totalorder %s18, 1
      %p177 = scmp.ne.s32.totalorder %s172, %s174
      %p178 = scmp.eq.s32.totalorder %s18, 0
      %p179 = por %p177, %p178
      %p180 = scmp.ne.s32.totalorder %s172, %s174
      %p181 = scmp.eq.s32.totalorder %s23, 1
      %p182 = por %p180, %p181
      %p183 = scmp.ne.s32.totalorder %s174, %s175
      %p184 = scmp.eq.s32.totalorder %s23, 0
      %p185 = por %p183, %p184
      %p186 = scmp.ne.s32.totalorder %s174, %s175
      %p187 = scmp.eq.s32.totalorder %s24, 1
      %p188 = por %p186, %p187
      %p190 = scmp.ne.s32.totalorder %s175, %s189
      %p191 = scmp.eq.s32.totalorder %s24, 0
      %p192 = por %p190, %p191
      %s194 = sadd.s32 %s193, 1
      %p197 = scmp.eq.s32.totalorder %s18, 1
      %p198 = scmp.ne.s32.totalorder %s193, %s195
      %p199 = scmp.eq.s32.totalorder %s18, 0
      %p200 = por %p198, %p199
      %p201 = scmp.ne.s32.totalorder %s193, %s195
      %p202 = scmp.eq.s32.totalorder %s23, 1
      %p203 = por %p201, %p202
      %p204 = scmp.ne.s32.totalorder %s195, %s196
      %p205 = scmp.eq.s32.totalorder %s23, 0
      %p206 = por %p204, %p205
      %p207 = scmp.ne.s32.totalorder %s195, %s196
      %p208 = scmp.eq.s32.totalorder %s24, 1
      %p209 = por %p207, %p208
      %p211 = scmp.ne.s32.totalorder %s196, %s210
      %p212 = scmp.eq.s32.totalorder %s24, 0
      %p213 = por %p211, %p212
      %s215 = sadd.s32 %s214, 1
      %p218 = scmp.eq.s32.totalorder %s18, 1
      %p219 = scmp.ne.s32.totalorder %s214, %s216
      %p220 = scmp.eq.s32.totalorder %s18, 0
      %p221 = por %p219, %p220
      %p222 = scmp.ne.s32.totalorder %s214, %s216
      %p223 = scmp.eq.s32.totalorder %s23, 1
      %p224 = por %p222, %p223
      %p225 = scmp.ne.s32.totalorder %s216, %s217
      %p226 = scmp.eq.s32.totalorder %s23, 0
      %p227 = por %p225, %p226
      %p228 = scmp.ne.s32.totalorder %s216, %s217
      %p229 = scmp.eq.s32.totalorder %s24, 1
      %p230 = por %p228, %p229
      %p232 = scmp.ne.s32.totalorder %s217, %s231
      %p233 = scmp.eq.s32.totalorder %s24, 0
      %p234 = por %p232, %p233
      %s235 = ssub.s32 %s18, %s25
      %p236 = scmp.eq.s32.totalorder %s235, 0
      %s238 = sadd.s32 %s237, 1
      %s239 = scalar_select %p236, %s237, %s238
      %p242 = pneg %p236
      %p243 = scmp.eq.s32.totalorder %s18, 1
      %p244 = por %p242, %p243
      %p245 = scmp.ne.s32.totalorder %s237, %s240
      %p246 = scmp.eq.s32.totalorder %s18, 0
      %p247 = por %p245, %p246
      %p248 = scmp.ne.s32.totalorder %s237, %s240
      %p249 = scmp.eq.s32.totalorder %s23, 1
      %p250 = por %p248, %p249
      %p251 = scmp.ne.s32.totalorder %s240, %s241
      %p252 = scmp.eq.s32.totalorder %s23, 0
      %p253 = por %p251, %p252
      %p254 = scmp.ne.s32.totalorder %s240, %s241
      %p255 = scmp.eq.s32.totalorder %s24, 1
      %p256 = por %p254, %p255
      %p258 = scmp.ne.s32.totalorder %s241, %s257
      %p259 = scmp.eq.s32.totalorder %s24, 0
      %p260 = por %p258, %p259
      %p261 = scmp.le.s32.totalorder 1, %s18
      %p262 = scmp.lt.s32.totalorder %s18, 3
      %p263 = pnand %p261, %p262
      %p264 = pneg %p263
      // Predicated region
      $region9: #{tpu_custom_call.1} parent=5 // pred_check
        _
      $region10: #{tpu_custom_call.1} parent=5 // pred_check_branch
        %266 = sbr.rel (%p263) target = $region12
      $region11: #{tpu_custom_call.1} parent=5 // pred_region
        %s267 = ssub.s32 %s18, 1
        // Predicated region
        $region13: #{tpu_custom_call.1} parent=11 // pred_check
          %p268 = pneg %p143
        $region14: #{tpu_custom_call.1} parent=11 // pred_check_branch
          %270 = sbr.rel (%p268) target = $region16
        $region15: #{tpu_custom_call.1} parent=11 // pred_region
          _
        $region16: #{tpu_custom_call.1} parent=11 // pred_fallthru
          _
        // Predicated region
        $region17: #{tpu_custom_call.1} parent=11 // pred_check
          %p271 = pneg %p164
        $region18: #{tpu_custom_call.1} parent=11 // pred_check_branch
          %273 = sbr.rel (%p271) target = $region20
        $region19: #{tpu_custom_call.1} parent=11 // pred_region
          _
        $region20: #{tpu_custom_call.1} parent=11 // pred_fallthru
          _
        // Predicated region
        $region21: #{tpu_custom_call.1} parent=11 // pred_check
          %p274 = pneg %p185
        $region22: #{tpu_custom_call.1} parent=11 // pred_check_branch
          %276 = sbr.rel (%p274) target = $region24
        $region23: #{tpu_custom_call.1} parent=11 // pred_region
          _
        $region24: #{tpu_custom_call.1} parent=11 // pred_fallthru
          _
        // Predicated region
        $region25: #{tpu_custom_call.1} parent=11 // pred_check
          %p277 = pneg %p206
        $region26: #{tpu_custom_call.1} parent=11 // pred_check_branch
          %279 = sbr.rel (%p277) target = $region28
        $region27: #{tpu_custom_call.1} parent=11 // pred_region
          _
        $region28: #{tpu_custom_call.1} parent=11 // pred_fallthru
          _
        // Predicated region
        $region29: #{tpu_custom_call.1} parent=11 // pred_check
          %p280 = pneg %p227
        $region30: #{tpu_custom_call.1} parent=11 // pred_check_branch
          %282 = sbr.rel (%p280) target = $region32
        $region31: #{tpu_custom_call.1} parent=11 // pred_region
          _
        $region32: #{tpu_custom_call.1} parent=11 // pred_fallthru
          _
      $region12: #{tpu_custom_call.1} parent=5 // pred_fallthru
        _
      %p283 = scmp.lt.s32.totalorder %s18, 2
      // Predicated region
      $region33: #{tpu_custom_call.1} parent=5 // pred_check
        %p284 = pneg %p283
      $region34: #{tpu_custom_call.1} parent=5 // pred_check_branch
        %286 = sbr.rel (%p284) target = $region36
      $region35: #{tpu_custom_call.1} parent=5 // pred_region
        // Predicated region
        $region37: #{tpu_custom_call.1} parent=35 // pred_check
          %p287 = pneg %p38
        $region38: #{tpu_custom_call.1} parent=35 // pred_check_branch
          %289 = sbr.rel (%p287) target = $region40
        $region39: #{tpu_custom_call.1} parent=35 // pred_region
          %p290 = scmp.lt.s32.totalorder %s18, 1
          %s291 = scalar_select %p290, %s18, 1
          %s292 = smul.addr %s291, 2
          %s293 = smul.addr %s292, 8
          %s294 = scalar_lea.vmem %s0, %s293
        $region40: #{tpu_custom_call.1} parent=35 // pred_fallthru
          _
        // Predicated region
        $region41: #{tpu_custom_call.1} parent=35 // pred_check
          %p295 = pneg %p64
        $region42: #{tpu_custom_call.1} parent=35 // pred_check_branch
          %297 = sbr.rel (%p295) target = $region44
        $region43: #{tpu_custom_call.1} parent=35 // pred_region
          %p298 = scmp.lt.s32.totalorder %s18, 1
          %s299 = scalar_select %p298, %s18, 1
          %s300 = smul.addr %s299, 2
          %s301 = scalar_lea.vmem %s1, %s300
        $region44: #{tpu_custom_call.1} parent=35 // pred_fallthru
          _
        // Predicated region
        $region45: #{tpu_custom_call.1} parent=35 // pred_check
          %p302 = pneg %p90
        $region46: #{tpu_custom_call.1} parent=35 // pred_check_branch
          %304 = sbr.rel (%p302) target = $region48
        $region47: #{tpu_custom_call.1} parent=35 // pred_region
          %p305 = scmp.lt.s32.totalorder %s18, 1
          %s306 = scalar_select %p305, %s18, 1
          %s307 = smul.addr %s306, 2
          %s308 = scalar_lea.vmem %s2, %s307
        $region48: #{tpu_custom_call.1} parent=35 // pred_fallthru
          _
        // Predicated region
        $region49: #{tpu_custom_call.1} parent=35 // pred_check
          %p309 = pneg %p116
        $region50: #{tpu_custom_call.1} parent=35 // pred_check_branch
          %311 = sbr.rel (%p309) target = $region52
        $region51: #{tpu_custom_call.1} parent=35 // pred_region
          %p312 = scmp.lt.s32.totalorder %s18, 1
          %s313 = scalar_select %p312, %s18, 1
          %s314 = smul.addr %s313, 4
          %s315 = smul.addr %s314, 8
          %s316 = scalar_lea.vmem %s3, %s315
        $region52: #{tpu_custom_call.1} parent=35 // pred_fallthru
          _
      $region36: #{tpu_custom_call.1} parent=5 // pred_fallthru
        _
      %p317 = scmp.le.s32.totalorder 1, %s18
      %p318 = scmp.lt.s32.totalorder %s18, 3
      %p319 = pnand %p317, %p318
      %p320 = pneg %p319
      // Predicated region
      $region53: #{tpu_custom_call.1} parent=5 // pred_check
        _
      $region54: #{tpu_custom_call.1} parent=5 // pred_check_branch
        %322 = sbr.rel (%p319) target = $region56
      $region55: #{tpu_custom_call.1} parent=5 // pred_region
        %s323 = ssub.s32 %s18, 1
        %p324 = scmp.lt.s32.totalorder %s23, 1
        %s325 = scalar_select %p324, %s23, 1
        %s326 = smul.addr %s325, 2
        %s327 = smul.addr %s326, 8
        %s328 = scalar_lea.vmem %s0, %s327
        %p329 = pneg %p44
        %p330 = pneg %p41
        %p331 = scmp.lt.s32.totalorder %s23, 1
        %s332 = scalar_select %p331, %s23, 1
        %s333 = smul.addr %s332, 2
        %s334 = scalar_lea.vmem %s1, %s333
        %p335 = pneg %p70
        %p336 = pneg %p67
        %p337 = scmp.lt.s32.totalorder %s23, 1
        %s338 = scalar_select %p337, %s23, 1
        %s339 = smul.addr %s338, 2
        %s340 = scalar_lea.vmem %s2, %s339
        %p341 = pneg %p96
        %p342 = pneg %p93
        %p343 = scmp.lt.s32.totalorder %s23, 1
        %s344 = scalar_select %p343, %s23, 1
        %s345 = smul.addr %s344, 4
        %s346 = smul.addr %s345, 8
        %s347 = scalar_lea.vmem %s3, %s346
        %p348 = pneg %p122
        %p349 = pneg %p119
        %p350 = pneg %p143
        %p351 = pneg %p140
        %p352 = pneg %p164
        %p353 = pneg %p161
        %p354 = pneg %p185
        %p355 = pneg %p182
        %p356 = pneg %p206
        %p357 = pneg %p203
        %p358 = pneg %p227
        %p359 = pneg %p224
        %p360 = pneg %p253
        %p361 = pneg %p250
        %s362 = sand.u32 %s240, 1
        %s363 = scalar_lea.sflag [#allocation4], %s362
        %s364 = sand.u32 %s240, 1
        %s365 = smul.addr %s364, 16
        %s366 = scalar_lea.vmem [#allocation3], %s365
        %p367 = scmp.lt.s32.totalorder %s23, 1
        %s368 = scalar_select %p367, %s23, 1
        %s369 = smul.addr %s368, 2
        %s370 = smul.addr %s369, 8
        %s371 = scalar_lea.vmem %s0, %s370
        %p372 = scmp.lt.s32.totalorder %s23, 1
        %s373 = scalar_select %p372, %s23, 1
        %s374 = smul.addr %s373, 2
        %s375 = scalar_lea.vmem %s1, %s374
        %p376 = scmp.lt.s32.totalorder %s23, 1
        %s377 = scalar_select %p376, %s23, 1
        %s378 = smul.addr %s377, 2
        %s379 = scalar_lea.vmem %s2, %s378
        %p380 = scmp.lt.s32.totalorder %s23, 1
        %s381 = scalar_select %p380, %s23, 1
        %s382 = smul.addr %s381, 4
        %s383 = smul.addr %s382, 8
        %s384 = scalar_lea.vmem %s3, %s383
        %v385 = vld [vmem:[%s371] sm:$0xff]
        %v386 = vld [vmem:[%s371 + $0x8] sm:$0xff]
        %v387 = vld [vmem:[%s375] sm:$0x3]
        %v388 = vld [vmem:[%s379] sm:$0x3]
        %v389 = vld [vmem:[%s384] sm:$0xff]
        %v390 = vld [vmem:[%s384 + $0x8] sm:$0xff]
        %v391 = vld [vmem:[%s384 + $0x10] sm:$0xff]
        %v392 = vld [vmem:[%s384 + $0x18] sm:$0xff]
        %v393 = vld [vmem:[%s5] sm:$0xff]
        %395 = vset.pattern.permute.xlu0 0
        %396 = vperm.xlu0 %395, %v393
        %v397 = vpop.permute.xlu0 %396
        %v400 = vlaneseq
        %v401 = vshrl.u32 %v400, 7
        %v402 = vsub.s32 0, %v401
        %v403 = vrot.slane %v387, %v402
        %v404 = vlaneseq
        %v405 = vshrl.u32 %v404, 7
        %v406 = vsub.s32 1, %v405
        %v407 = vrot.slane %v387, %v406
        %v410 = vmul.f32 %v397, %v403
        %v411 = vmul.f32 %v397, %v407
        %v412 = vadd.f32 %v385, %v410
        %v413 = vadd.f32 %v386, %v411
        %v414 = vadd.f32 %v412, %v413
        %415 = vadd.xlane.f32.xlu0 %v414
        %v416 = vpop.xlane.xlu0 %415
        %v417 = vrcp.pop 256.0
        %v418 = vmul.f32 %v416, %v417
        %v419 = vmul.f32 %v412, %v412
        %v420 = vmul.f32 %v413, %v413
        %v421 = vadd.f32 %v419, %v420
        %422 = vadd.xlane.f32.xlu0 %v421
        %v423 = vpop.xlane.xlu0 %422
        %v424 = vmul.f32 %v423, %v417
        %v425 = vmul.f32 %v418, %v418
        %v426 = vsub.f32 %v424, %v425
        %v427 = vadd.f32 %v426, 1e-05
        %v428 = vrsqrt.pop %v427
        %v429 = vmul.f32 %v389, %v428
        %v430 = vmul.f32 %v429, %v418
        %v431 = vsub.f32 %v390, %v430
        %433 = vset.pattern.permute.xlu0 0
        %434 = vperm.xlu0 %433, %v429
        %v435 = vpop.permute.xlu0 %434
        %v437 = vmul.f32 %v435, %v412
        %v438 = vmul.f32 %v435, %v413
        %440 = vset.pattern.permute.xlu0 0
        %441 = vperm.xlu0 %440, %v431
        %v442 = vpop.permute.xlu0 %441
        %v444 = vadd.f32 %v437, %v442
        %v445 = vadd.f32 %v438, %v442
        %446 = vrot.lane.b32.xlu0 %v444, 17
        %v447 = vpop.permute.xlu0 %446
        %448 = vrot.lane.b32.xlu0 %v445, 17
        %v449 = vpop.permute.xlu0 %448
        %v450 = vlaneseq
        %v451 = vand.u32 %v450, 127
        %vm452 = vcmp.lt.s32.totalorder %v451, 17
        %v453 = vsel %vm452, %v447, %v449
        %v454 = vsel %vm452, %v449, %v447
        %v455 = vld [vmem:[%s4] ss:$8 sm:$0x3]
        %v457 = vlaneseq
        %v458 = vshrl.u32 %v457, 7
        %v459 = vsub.s32 0, %v458
        %v460 = vrot.slane %v455, %v459
        %v461 = vlaneseq
        %v462 = vshrl.u32 %v461, 7
        %v463 = vsub.s32 1, %v462
        %v464 = vrot.slane %v455, %v463
        %v467 = vmul.f32 %v454, %v460
        %v468 = vmul.f32 %v453, %v464
        %469 = vst [vmem:[#allocation2] sm:$0xff] %v467
        %470 = vst [vmem:[#allocation2 + $0x8] sm:$0xff] %v468
        %471 = vrot.lane.b32.xlu0 %v444, 16
        %v472 = vpop.permute.xlu0 %471
        %473 = vrot.lane.b32.xlu0 %v445, 16
        %v474 = vpop.permute.xlu0 %473
        %vm475 = vcmp.lt.s32.totalorder %v451, 16
        %v476 = vsel %vm475, %v472, %v474
        %v477 = vsel %vm475, %v474, %v472
        %s478 = scalar_lea.vmem %s4, 1
        %v479 = vld [vmem:[%s478] ss:$8 sm:$0x3]
        %v481 = vlaneseq
        %v482 = vshrl.u32 %v481, 7
        %v483 = vsub.s32 0, %v482
        %v484 = vrot.slane %v479, %v483
        %v485 = vlaneseq
        %v486 = vshrl.u32 %v485, 7
        %v487 = vsub.s32 1, %v486
        %v488 = vrot.slane %v479, %v487
        %v491 = vmul.f32 %v477, %v484
        %v492 = vmul.f32 %v476, %v488
        %493 = vst [vmem:[#allocation2 + $0x10] sm:$0xff] %v491
        %494 = vst [vmem:[#allocation2 + $0x18] sm:$0xff] %v492
        %495 = vrot.lane.b32.xlu0 %v444, 15
        %v496 = vpop.permute.xlu0 %495
        %497 = vrot.lane.b32.xlu0 %v445, 15
        %v498 = vpop.permute.xlu0 %497
        %vm499 = vcmp.lt.s32.totalorder %v451, 15
        %v500 = vsel %vm499, %v496, %v498
        %v501 = vsel %vm499, %v498, %v496
        %s502 = scalar_lea.vmem %s4, 2
        %v503 = vld [vmem:[%s502] ss:$8 sm:$0x3]
        %v505 = vlaneseq
        %v506 = vshrl.u32 %v505, 7
        %v507 = vsub.s32 0, %v506
        %v508 = vrot.slane %v503, %v507
        %v509 = vlaneseq
        %v510 = vshrl.u32 %v509, 7
        %v511 = vsub.s32 1, %v510
        %v512 = vrot.slane %v503, %v511
        %v515 = vmul.f32 %v501, %v508
        %v516 = vmul.f32 %v500, %v512
        %517 = vst [vmem:[#allocation2 + $0x20] sm:$0xff] %v515
        %518 = vst [vmem:[#allocation2 + $0x28] sm:$0xff] %v516
        %519 = vrot.lane.b32.xlu0 %v444, 1
        %v520 = vpop.permute.xlu0 %519
        %521 = vrot.lane.b32.xlu0 %v445, 1
        %v522 = vpop.permute.xlu0 %521
        %vm523 = vcmp.lt.s32.totalorder %v451, 1
        %v524 = vsel %vm523, %v520, %v522
        %v525 = vsel %vm523, %v522, %v520
        %s526 = scalar_lea.vmem %s4, 3
        %v527 = vld [vmem:[%s526] ss:$8 sm:$0x3]
        %v529 = vlaneseq
        %v530 = vshrl.u32 %v529, 7
        %v531 = vsub.s32 0, %v530
        %v532 = vrot.slane %v527, %v531
        %v533 = vlaneseq
        %v534 = vshrl.u32 %v533, 7
        %v535 = vsub.s32 1, %v534
        %v536 = vrot.slane %v527, %v535
        %v539 = vmul.f32 %v525, %v532
        %v540 = vmul.f32 %v524, %v536
        %541 = vst [vmem:[#allocation2 + $0x30] sm:$0xff] %v539
        %542 = vst [vmem:[#allocation2 + $0x38] sm:$0xff] %v540
        %543 = vst [vmem:[#allocation2 + $0x40] sm:$0xff] %v444
        %544 = vst [vmem:[#allocation2 + $0x48] sm:$0xff] %v445
        %545 = vrot.lane.b32.xlu0 %v444, 127
        %v546 = vpop.permute.xlu0 %545
        %547 = vrot.lane.b32.xlu0 %v445, 127
        %v548 = vpop.permute.xlu0 %547
        %vm549 = vcmp.lt.s32.totalorder %v451, 127
        %v550 = vsel %vm549, %v546, %v548
        %v551 = vsel %vm549, %v548, %v546
        %s552 = scalar_lea.vmem %s4, 5
        %v553 = vld [vmem:[%s552] ss:$8 sm:$0x3]
        %v555 = vlaneseq
        %v556 = vshrl.u32 %v555, 7
        %v557 = vsub.s32 0, %v556
        %v558 = vrot.slane %v553, %v557
        %v559 = vlaneseq
        %v560 = vshrl.u32 %v559, 7
        %v561 = vsub.s32 1, %v560
        %v562 = vrot.slane %v553, %v561
        %v565 = vmul.f32 %v550, %v558
        %v566 = vmul.f32 %v551, %v562
        %567 = vst [vmem:[#allocation2 + $0x50] sm:$0xff] %v565
        %568 = vst [vmem:[#allocation2 + $0x58] sm:$0xff] %v566
        %569 = vrot.lane.b32.xlu0 %v444, 113
        %v570 = vpop.permute.xlu0 %569
        %571 = vrot.lane.b32.xlu0 %v445, 113
        %v572 = vpop.permute.xlu0 %571
        %vm573 = vcmp.lt.s32.totalorder %v451, 113
        %v574 = vsel %vm573, %v570, %v572
        %v575 = vsel %vm573, %v572, %v570
        %s576 = scalar_lea.vmem %s4, 6
        %v577 = vld [vmem:[%s576] ss:$8 sm:$0x3]
        %v579 = vlaneseq
        %v580 = vshrl.u32 %v579, 7
        %v581 = vsub.s32 0, %v580
        %v582 = vrot.slane %v577, %v581
        %v583 = vlaneseq
        %v584 = vshrl.u32 %v583, 7
        %v585 = vsub.s32 1, %v584
        %v586 = vrot.slane %v577, %v585
        %v589 = vmul.f32 %v574, %v582
        %v590 = vmul.f32 %v575, %v586
        %591 = vst [vmem:[#allocation2 + $0x60] sm:$0xff] %v589
        %592 = vst [vmem:[#allocation2 + $0x68] sm:$0xff] %v590
        %593 = vrot.lane.b32.xlu0 %v444, 112
        %v594 = vpop.permute.xlu0 %593
        %595 = vrot.lane.b32.xlu0 %v445, 112
        %v596 = vpop.permute.xlu0 %595
        %vm597 = vcmp.lt.s32.totalorder %v451, 112
        %v598 = vsel %vm597, %v594, %v596
        %v599 = vsel %vm597, %v596, %v594
        %s600 = scalar_lea.vmem %s4, 7
        %v601 = vld [vmem:[%s600] ss:$8 sm:$0x3]
        %v603 = vlaneseq
        %v604 = vshrl.u32 %v603, 7
        %v605 = vsub.s32 0, %v604
        %v606 = vrot.slane %v601, %v605
        %v607 = vlaneseq
        %v608 = vshrl.u32 %v607, 7
        %v609 = vsub.s32 1, %v608
        %v610 = vrot.slane %v601, %v609
        %v613 = vmul.f32 %v598, %v606
        %v614 = vmul.f32 %v599, %v610
        %615 = vst [vmem:[#allocation2 + $0x70] sm:$0xff] %v613
        %616 = vst [vmem:[#allocation2 + $0x78] sm:$0xff] %v614
        %617 = vrot.lane.b32.xlu0 %v444, 111
        %v618 = vpop.permute.xlu0 %617
        %619 = vrot.lane.b32.xlu0 %v445, 111
        %v620 = vpop.permute.xlu0 %619
        %vm621 = vcmp.lt.s32.totalorder %v451, 111
        %v622 = vsel %vm621, %v618, %v620
        %v623 = vsel %vm621, %v620, %v618
        %s624 = scalar_lea.vmem %s4, 16
        %v625 = vld [vmem:[%s624] ss:$8 sm:$0x3]
        %v627 = vlaneseq
        %v628 = vshrl.u32 %v627, 7
        %v629 = vsub.s32 0, %v628
        %v630 = vrot.slane %v625, %v629
        %v631 = vlaneseq
        %v632 = vshrl.u32 %v631, 7
        %v633 = vsub.s32 1, %v632
        %v634 = vrot.slane %v625, %v633
        %v637 = vmul.f32 %v622, %v630
        %v638 = vmul.f32 %v623, %v634
        %639 = vst [vmem:[#allocation2 + $0x80] sm:$0xff] %v637
        %640 = vst [vmem:[#allocation2 + $0x88] sm:$0xff] %v638
        %v641 = vld [vmem:[%s7] sm:$0xff]
        %v642 = vld [vmem:[#allocation2] sm:$0xff]
        %v643 = vld [vmem:[#allocation2 + $0x8] sm:$0xff]
        %v644 = vld [vmem:[#allocation2 + $0x10] sm:$0xff]
        %v645 = vld [vmem:[#allocation2 + $0x18] sm:$0xff]
        %v646 = vld [vmem:[#allocation2 + $0x20] sm:$0xff]
        %v647 = vld [vmem:[#allocation2 + $0x28] sm:$0xff]
        %v648 = vld [vmem:[#allocation2 + $0x30] sm:$0xff]
        %v649 = vld [vmem:[#allocation2 + $0x38] sm:$0xff]
        %v650 = vld [vmem:[#allocation2 + $0x40] sm:$0xff]
        %v651 = vld [vmem:[#allocation2 + $0x48] sm:$0xff]
        %v652 = vld [vmem:[#allocation2 + $0x50] sm:$0xff]
        %v653 = vld [vmem:[#allocation2 + $0x58] sm:$0xff]
        %v654 = vld [vmem:[#allocation2 + $0x60] sm:$0xff]
        %v655 = vld [vmem:[#allocation2 + $0x68] sm:$0xff]
        %v656 = vld [vmem:[#allocation2 + $0x70] sm:$0xff]
        %v657 = vld [vmem:[#allocation2 + $0x78] sm:$0xff]
        %v658 = vld [vmem:[#allocation2 + $0x80] sm:$0xff]
        %v659 = vld [vmem:[#allocation2 + $0x88] sm:$0xff]
        %v660 = vld [vmem:[%s8] sm:$0xff]
        %662 = vset.pattern.permute.xlu0 0
        %663 = vperm.xlu0 %662, %v660
        %v664 = vpop.permute.xlu0 %663
        %vm666 = vcmask 588800
        %v668 = vsel %vm666, %v641, 0
        %670 = vmatprep.subr.mxu0 0.0
        %671 = vmatpush1.msra.mxu0 0.0
        %672 = vmatprep.subr.mxu0 0.0
        %673 = vmatpush1.msra.mxu0 0.0
        %674 = vmatprep.subr.mxu0 0.0
        %675 = vmatpush1.msra.mxu0 0.0
        %676 = vmatprep.subr.mxu0 0.0
        %677 = vmatpush1.msra.mxu0 0.0
        %678 = vmatprep.subr.mxu0 0.0
        %679 = vmatpush1.msra.mxu0 0.0
        %680 = vmatprep.subr.mxu0 0.0
        %681 = vmatpush1.msra.mxu0 0.0
        %682 = vmatprep.subr.mxu0 0.0
        %683 = vmatpush1.msra.mxu0 0.0
        %684 = vmatprep.subr.mxu0 %v659
        %685 = vmatpush1.msra.mxu0 %v658
        %686 = vmatprep.subr.mxu0 %v657
        %687 = vmatpush1.msra.mxu0 %v656
        %688 = vmatprep.subr.mxu0 %v655
        %689 = vmatpush1.msra.mxu0 %v654
        %690 = vmatprep.subr.mxu0 %v653
        %691 = vmatpush1.msra.mxu0 %v652
        %692 = vmatprep.subr.mxu0 %v651
        %693 = vmatpush1.msra.mxu0 %v650
        %694 = vmatprep.subr.mxu0 %v649
        %695 = vmatpush1.msra.mxu0 %v648
        %696 = vmatprep.subr.mxu0 %v647
        %697 = vmatpush1.msra.mxu0 %v646
        %698 = vmatprep.subr.mxu0 %v645
        %699 = vmatpush1.msra.mxu0 %v644
        %700 = vmatprep.subr.mxu0 %v643
        %701 = vmatpush1.msra.mxu0 %v642
        %702 = vmatprep.subr.mxu0 0.0
        %703 = vmatpush2.msra.mxu0 0.0
        %704 = vmatprep.subr.mxu0 0.0
        %705 = vmatpush2.msra.mxu0 0.0
        %706 = vmatprep.subr.mxu0 0.0
        %707 = vmatpush2.msra.mxu0 0.0
        %708 = vmatprep.subr.mxu0 0.0
        %709 = vmatpush2.msra.mxu0 0.0
        %710 = vmatprep.subr.mxu0 0.0
        %711 = vmatpush2.msra.mxu0 0.0
        %712 = vmatprep.subr.mxu0 0.0
        %713 = vmatpush2.msra.mxu0 0.0
        %714 = vmatprep.subr.mxu0 0.0
        %715 = vmatpush2.msra.mxu0 0.0
        %716 = vmatprep.subr.mxu0 0.0
        %717 = vmatpush2.msra.mxu0 0.0
        %718 = vmatprep.subr.mxu0 0.0
        %719 = vmatpush2.msra.mxu0 0.0
        %720 = vmatprep.subr.mxu0 0.0
        %721 = vmatpush2.msra.mxu0 0.0
        %722 = vmatprep.subr.mxu0 0.0
        %723 = vmatpush2.msra.mxu0 0.0
        %724 = vmatprep.subr.mxu0 0.0
        %725 = vmatpush2.msra.mxu0 0.0
        %726 = vmatprep.subr.mxu0 0.0
        %727 = vmatpush2.msra.mxu0 0.0
        %728 = vmatprep.subr.mxu0 0.0
        %729 = vmatpush2.msra.mxu0 0.0
        %730 = vmatprep.subr.mxu0 0.0
        %731 = vmatpush2.msra.mxu0 0.0
        %732 = vmatprep.subr.mxu0 0.0
        %733 = vmatpush2.msra.mxu0 0.0
        %734 = vmatprep.mubr.f32.mxu0 0.0
        %735 = vmatmul.mubr.f32.gmra.mxu0 %v668
        %v736 = vpop.f32.mrf.mxu0
        %v737 = vadd.f32 %v664, %v736
        %v738 = vpop.f32.mrf.mxu0
        %v739 = vadd.f32 %v664, %v738
        %740 = vdwg.mxu0
        %v741 = vmul.f32 %v737, %v737
        %v742 = vmul.f32 %v739, %v739
        %v743 = vrot.slane %v741, 4
        %v744 = vadd.f32 %v741, %v743
        %v745 = vrot.slane %v744, 2
        %v746 = vadd.f32 %v744, %v745
        %v747 = vrot.slane %v746, 1
        %v748 = vadd.f32 %v746, %v747
        %v749 = vrot.slane %v742, 4
        %v750 = vadd.f32 %v742, %v749
        %v751 = vrot.slane %v750, 2
        %v752 = vadd.f32 %v750, %v751
        %v753 = vrot.slane %v752, 1
        %v754 = vadd.f32 %v752, %v753
        %v755 = vmul.f32 %v748, 0.125
        %v756 = vmul.f32 %v754, 0.125
        %v757 = vadd.f32 %v755, 1e-08
        %v758 = vadd.f32 %v756, 1e-08
        %v759 = vrsqrt.pop %v757
        %v760 = vrsqrt.pop %v758
        %v761 = vmul.f32 %v737, %v759
        %v762 = vmul.f32 %v739, %v760
        %vm763 = vcmp.gt.f32.partialorder %v761, 0.0
        %vm764 = vcmp.gt.f32.partialorder %v762, 0.0
        %v765 = vmul.f32 %v761, 0.2
        %v766 = vmul.f32 %v762, 0.2
        %v767 = vsel %vm763, %v761, %v765
        %v768 = vsel %vm764, %v762, %v766
        %v769 = vld [vmem:[%s6] sm:$0xff]
        %771 = vset.pattern.permute.xlu0 0
        %772 = vperm.xlu0 %771, %v769
        %v773 = vpop.permute.xlu0 %772
        %v776 = vlaneseq
        %v777 = vshrl.u32 %v776, 7
        %v778 = vsub.s32 0, %v777
        %v779 = vrot.slane %v388, %v778
        %v780 = vlaneseq
        %v781 = vshrl.u32 %v780, 7
        %v782 = vsub.s32 1, %v781
        %v783 = vrot.slane %v388, %v782
        %v786 = vmul.f32 %v773, %v779
        %v787 = vmul.f32 %v773, %v783
        %v788 = vadd.f32 %v767, %v786
        %v789 = vadd.f32 %v768, %v787
        %v790 = vadd.f32 %v788, %v789
        %791 = vadd.xlane.f32.xlu0 %v790
        %v792 = vpop.xlane.xlu0 %791
        %v793 = vmul.f32 %v792, %v417
        %v794 = vmul.f32 %v788, %v788
        %v795 = vmul.f32 %v789, %v789
        %v796 = vadd.f32 %v794, %v795
        %797 = vadd.xlane.f32.xlu0 %v796
        %v798 = vpop.xlane.xlu0 %797
        %v799 = vmul.f32 %v798, %v417
        %v800 = vmul.f32 %v793, %v793
        %v801 = vsub.f32 %v799, %v800
        %v802 = vadd.f32 %v801, 1e-05
        %v803 = vrsqrt.pop %v802
        %v804 = vmul.f32 %v391, %v803
        %v805 = vmul.f32 %v804, %v793
        %v806 = vsub.f32 %v392, %v805
        %808 = vset.pattern.permute.xlu0 0
        %809 = vperm.xlu0 %808, %v804
        %v810 = vpop.permute.xlu0 %809
        %v812 = vmul.f32 %v810, %v788
        %v813 = vmul.f32 %v810, %v789
        %815 = vset.pattern.permute.xlu0 0
        %816 = vperm.xlu0 %815, %v806
        %v817 = vpop.permute.xlu0 %816
        %v819 = vadd.f32 %v812, %v817
        %v820 = vadd.f32 %v813, %v817
        %821 = vst [vmem:[%s366] sm:$0xff] %v819
        %822 = vst [vmem:[%s366 + $0x8] sm:$0xff] %v820
        %s823 = sand.u32 %s240, 1
        %s824 = scalar_lea.sflag [#allocation4], %s823
        %s825 = sand.u32 %s240, 1
        %s826 = smul.addr %s825, 16
        %s827 = scalar_lea.vmem [#allocation3], %s826
        // Predicated region
        $region57: #{tpu_custom_call.1} parent=55 // pred_check
          %p828 = pneg %p250
        $region58: #{tpu_custom_call.1} parent=55 // pred_check_branch
          %830 = sbr.rel (%p828) target = $region60
        $region59: #{tpu_custom_call.1} parent=55 // pred_region
          %s832 = ssub.s32 256, 256
          %833 = vsyncadd %s824, %s832
          %s834 = smul.addr %s23, 2
          %s835 = smul.addr %s834, 128
          %s836 = scalar_lea.hbm %s9, %s835
          %s838 = sshll.u32 %s827, 4
          %s839 = int_to_ptr.vmem [resolvable:$true] %s838
          %841 = dma.vmem_to_hbm [thread:$0]  %s839, 256, %s836, %s824
        $region60: #{tpu_custom_call.1} parent=55 // pred_fallthru
          _
      $region56: #{tpu_custom_call.1} parent=5 // pred_fallthru
        _
      %p842 = scmp.le.s32.totalorder 2, %s18
      // Predicated region
      $region61: #{tpu_custom_call.1} parent=5 // pred_check
        %p843 = pneg %p842
      $region62: #{tpu_custom_call.1} parent=5 // pred_check_branch
        %845 = sbr.rel (%p843) target = $region64
      $region63: #{tpu_custom_call.1} parent=5 // pred_region
        %s846 = ssub.s32 %s18, 2
        // Predicated region
        $region65: #{tpu_custom_call.1} parent=63 // pred_check
          %p847 = pneg %p256
        $region66: #{tpu_custom_call.1} parent=63 // pred_check_branch
          %849 = sbr.rel (%p847) target = $region68
        $region67: #{tpu_custom_call.1} parent=63 // pred_region
          %s850 = sand.u32 %s241, 1
          %s851 = scalar_lea.sflag [#allocation4], %s850
          %s852 = sand.u32 %s241, 1
          %s853 = smul.addr %s852, 16
          %s854 = scalar_lea.vmem [#allocation3], %s853
          %855 = dma.done %s851, 256
        $region68: #{tpu_custom_call.1} parent=63 // pred_fallthru
          _
      $region64: #{tpu_custom_call.1} parent=5 // pred_fallthru
        _
    $region6: #{tpu_custom_call.1} parent=1 // loop_footer
      %s22 = sadd.s32 1, %s18
    $region7: #{tpu_custom_call.1} parent=1 // loop_footer_branch
      %17 = sbr.rel target = $region3
    $region8: #{tpu_custom_call.1} parent=1 // loop_exit
      _
    %856 = vsyncpa [#allocation4], 1
    %s857 = scalar_lea.sflag [#allocation4], 1
    %858 = vsyncpa %s857, 1

</llo_original>
